<compile_context>
chip_gen: v6e
topology: v6e:2x2x1
jax: 0.10.0
libtpu: 0.0.40
codegen_flags: <defaults>
</compile_context>

<pallas_src>
import jax
import jax.numpy as jnp
from jax import lax
from jax.experimental import pallas as pl
from jax.experimental.pallas import tpu as pltpu

HIDDEN = 128
LANES = 128


def _round_up(n, m):
    return ((n + m - 1) // m) * m


def _vmem_budget_bytes():
    # ~72% of per-core physical VMEM: ~46 MiB on v7x (64 MiB), ~92 MiB on v5e/v6e (128 MiB).
    cap = 64 * 1024 * 1024  # conservative fallback = v7x physical size
    try:
        info = pltpu.get_tpu_info()
        cap = int(getattr(info, "vmem_capacity_bytes", cap)) or cap
    except Exception:
        pass
    return int(0.72 * cap)


def _choose_batch_tile(B, C, x_itemsize, block_b, vmem_budget):
    """Pick batch tile TB and padded batch Bp.

    * x block (TB, C): TB must be a multiple of 8 (sublane).
    * out block (1, TB): TB must be a multiple of 128 unless TB == Bp.
    * TB as large as the VMEM budget allows (amortize per-grid-step overhead),
      but prefer >=2 grid steps (v7x megacore) when each half-tile still moves
      >= ~512 KiB of x.
    """
    b_full = _round_up(B, 8)
    per_row = 2 * C * x_itemsize + 3 * HIDDEN * 4 + 8   # 2x x row + f32 intermediates + out
    resident = C * HIDDEN * x_itemsize + 2 * HIDDEN * 4
    avail = max(vmem_budget - resident - (2 << 20), 8 * per_row)
    tb = int(min(block_b, avail // per_row, b_full))

    # v7x megacore: only worth splitting if each half-tile is still >= ~512 KiB of x.
    half = _round_up(B, 2 * LANES) // 2                 # multiple of 128
    if LANES <= half < tb and half * C * x_itemsize >= (512 << 10):
        tb = half

    if tb >= b_full:
        tb = b_full                                      # single tile covering the (padded) batch
    else:
        tb = max(LANES, (tb // LANES) * LANES)           # multi-step: lane-dense out needs TB % 128 == 0
    return tb, _round_up(B, tb)


def discriminator_kernel(x_ref, w1_ref, cst_ref, b2_ref, o_ref):
    # Layer 1 on the MXU: [TB, C] @ [C, 128], f32 accumulation (inputs may be bf16).
    h = jnp.dot(x_ref[...], w1_ref[...], preferred_element_type=jnp.float32)
    h = h + cst_ref[0:1, :]                       # + b1, broadcast over the batch rows
    h = jnp.where(h > 0, h, 0.01 * h)             # LeakyReLU(0.01), kept in f32 (VPU)
    # Layer 2 (out_features = 1): contract the [1, 128] w2 row against h's hidden axis
    # ([TB, 128]) -> (1, TB).  Same dot_general pattern as Q.K^T; result is already
    # lane-dense so the bias add, sigmoid and store all run on full vregs.
    z = lax.dot_general(
        cst_ref[1:2, :], h,
        dimension_numbers=(((1,), (1,)), ((), ())),
        preferred_element_type=jnp.float32,
    ) + b2_ref[0]
    # Sigmoid: EUP exp + exact reciprocal (approx=True could give p > 1 -> NaN in BCE).
    o_ref[...] = pl.reciprocal(1.0 + jnp.exp(-z), approx=False).astype(o_ref.dtype)


def discriminator_forward(x, w1, b1, w2, b2, *, block_b=2048, compute_dtype=jnp.bfloat16):
    """Forward of Discriminator.

    x:  [B, C]    w1: [C, 128]   b1: [1, 128]
    w2: [128, 1]  b2: [1, 1]     returns [B, 1] in x.dtype
    """
    B, C = x.shape
    out_dtype = x.dtype

    # Stream x / w1 in compute_dtype (bf16 default: ~2x less HBM traffic, MXU-native
    # on v5e/v6e/v7x; accumulation stays f32).  Pass compute_dtype=None to keep x.dtype.
    if compute_dtype is None:
        compute_dtype = x.dtype
    x_s = x.astype(compute_dtype)
    w1_s = w1.astype(compute_dtype)
    x_itemsize = jnp.dtype(compute_dtype).itemsize
    out_itemsize = jnp.dtype(out_dtype).itemsize

    vmem_budget = _vmem_budget_bytes()
    TB, Bp = _choose_batch_tile(B, C, x_itemsize, block_b, vmem_budget)
    if Bp != B:
        # Padded rows compute garbage sigmoid values; they are sliced off below and
        # are never reduced over inside the kernel.
        x_s = jnp.pad(x_s, ((0, Bp - B), (0, 0)))
    grid = (Bp // TB,)

    # Stack the two resident f32 rows ([b1; w2^T]) into one (2, 128) operand.
    consts = jnp.concatenate(
        [b1.reshape(1, HIDDEN), w2.reshape(1, HIDDEN)], axis=0
    ).astype(jnp.float32)
    b2_s = b2.reshape(1).astype(jnp.float32)      # SMEM scalar

    # Scoped-VMEM request: double-buffered x/out tiles + resident weights + headroom
    # for f32 intermediates, capped at the per-generation budget.
    vmem_est = (
        2 * TB * C * x_itemsize        # x tiles (double-buffered)
        + 2 * TB * out_itemsize        # out tiles (double-buffered)
        + C * HIDDEN * x_itemsize      # w1 (resident)
        + 2 * HIDDEN * 4               # [b1; w2] rows (resident)
        + 4 * TB * HIDDEN * 4          # f32 intermediates / headroom
    )
    vmem_limit = int(min(vmem_budget, max(4 << 20, 2 * vmem_est)))

    cost = pl.CostEstimate(
        flops=2 * Bp * C * HIDDEN + 6 * Bp * HIDDEN,
        transcendentals=Bp,
        bytes_accessed=(Bp * C * x_itemsize + C * HIDDEN * x_itemsize
                        + 2 * HIDDEN * 4 + 4 + Bp * out_itemsize),
    )

    def build(single_buffer_resident):
        res_kwargs = dict(pipeline_mode=pl.Buffered(1)) if single_buffer_resident else {}
        return pl.pallas_call(
            discriminator_kernel,
            out_shape=jax.ShapeDtypeStruct((1, Bp), out_dtype),
            grid=grid,
            in_specs=[
                pl.BlockSpec((TB, C), lambda i: (i, 0)),                     # x tile, pipelined
                pl.BlockSpec((C, HIDDEN), lambda i: (0, 0), **res_kwargs),   # w1 resident in VMEM
                pl.BlockSpec((2, HIDDEN), lambda i: (0, 0), **res_kwargs),   # [b1; w2^T] resident
                pl.BlockSpec((1,), lambda i: (0,), memory_space=pltpu.SMEM),  # b2 scalar
            ],
            out_specs=pl.BlockSpec((1, TB), lambda i: (0, i)),               # lane-dense output row
            compiler_params=pltpu.CompilerParams(
                dimension_semantics=("parallel",),   # shard batch tiles across TCs (v7x)
                vmem_limit_bytes=vmem_limit,
            ),
            cost_estimate=cost,
        )

    try:
        out_row = build(True)(x_s, w1_s, consts, b2_s)
    except Exception:
        # Some runtimes may reject pl.Buffered(1); default double-buffering is still correct.
        out_row = build(False)(x_s, w1_s, consts, b2_s)

    # Drop batch padding; x.view(B, -1) is an identity for a [B, 1] result.
    return out_row[0, :B].reshape(B, -1).astype(out_dtype)


def init_params(key, in_channels):
    # torch.nn.Linear default init: U(-1/sqrt(fan_in), 1/sqrt(fan_in))
    k1, k2, k3, k4 = jax.random.split(key, 4)
    bound1 = 1.0 / jnp.sqrt(in_channels)
    bound2 = 1.0 / jnp.sqrt(HIDDEN)
    w1 = jax.random.uniform(k1, (in_channels, HIDDEN), jnp.float32, -bound1, bound1)
    b1 = jax.random.uniform(k2, (1, HIDDEN), jnp.float32, -bound1, bound1)
    w2 = jax.random.uniform(k3, (HIDDEN, 1), jnp.float32, -bound2, bound2)
    b2 = jax.random.uniform(k4, (1, 1), jnp.float32, -bound2, bound2)
    return w1, b1, w2, b2


if __name__ == "__main__":
    key = jax.random.PRNGKey(0)
    kx, kp = jax.random.split(key)

    batch, in_channels = 8, 16
    x = jax.random.normal(kx, (batch, in_channels), jnp.float32)
    w1, b1, w2, b2 = init_params(kp, in_channels)

    # Pure-JAX reference.
    h_ref = x @ w1 + b1
    h_ref = jnp.where(h_ref > 0, h_ref, 0.01 * h_ref)
    ref = jax.nn.sigmoid(h_ref @ w2 + b2).reshape(batch, -1)

    # f32 streaming path (tight check).
    out_f32 = jax.block_until_ready(
        discriminator_forward(x, w1, b1, w2, b2, compute_dtype=jnp.float32))
    assert out_f32.shape == (batch, 1)
    assert jnp.allclose(out_f32, ref, atol=2e-3, rtol=2e-3)

    # Default path: bf16 streaming of x/w1 with f32 accumulation (looser tolerance).
    out = jax.block_until_ready(discriminator_forward(x, w1, b1, w2, b2))
    assert out.shape == (batch, 1)
    assert jnp.allclose(out, ref, atol=2e-2, rtol=2e-2)

    print("KERNEL_OK")
</pallas_src>

<mosaic_0001>
module attributes {stable_mosaic.version = 11 : i64} {
  func.func @discriminator_kernel(%arg0: i32, %arg1: memref<8x16xf32, #tpu.memory_space<vmem>>, %arg2: memref<16x128xf32, #tpu.memory_space<vmem>>, %arg3: memref<2x128xf32, #tpu.memory_space<vmem>>, %arg4: memref<1xf32, #tpu.memory_space<smem>>, %arg5: memref<1x8xf32, #tpu.memory_space<vmem>>) attributes {dimension_semantics = [#tpu.dimension_semantics<parallel>], iteration_bounds = array<i64: 1>, scalar_prefetch = 0 : i64, scratch_operands = 0 : i64, tpu.core_type = #tpu.core_type<tc>, window_params = [{transform_indices = @transform_0, window_bounds = array<i64: 8, 16>}, {pipeline_mode = #tpu.pipeline_mode<synchronous>, transform_indices = @transform_1, window_bounds = array<i64: 16, 128>}, {pipeline_mode = #tpu.pipeline_mode<synchronous>, transform_indices = @transform_2, window_bounds = array<i64: 2, 128>}, {transform_indices = @transform_3, window_bounds = array<i64: 1>}, {transform_indices = @transform_4, window_bounds = array<i64: 1, 8>}]} {
    %c0 = arith.constant 0 : index
    %c0_0 = arith.constant 0 : index
    %0 = vector.load %arg1[%c0, %c0_0] : memref<8x16xf32, #tpu.memory_space<vmem>>, vector<8x16xf32>
    %c0_1 = arith.constant 0 : index
    %c0_2 = arith.constant 0 : index
    %1 = vector.load %arg2[%c0_1, %c0_2] : memref<16x128xf32, #tpu.memory_space<vmem>>, vector<16x128xf32>
    %cst = arith.constant dense<0.000000e+00> : vector<8x128xf32>
    %2 = tpu.matmul %0, %1, %cst {dimension_numbers = #tpu.dot_dimension_numbers<[1], [0], [0], [1], [0, 0, 1, 1], [], []>} : vector<8x16xf32>, vector<16x128xf32>, vector<8x128xf32> -> vector<8x128xf32>
    %c0_3 = arith.constant 0 : index
    %c0_4 = arith.constant 0 : index
    %3 = vector.load %arg3[%c0_3, %c0_4] : memref<2x128xf32, #tpu.memory_space<vmem>>, vector<1x128xf32>
    %4 = vector.broadcast %3 : vector<1x128xf32> to vector<8x128xf32>
    %5 = arith.addf %2, %4 : vector<8x128xf32>
    %cst_5 = arith.constant 0.000000e+00 : f32
    %6 = vector.broadcast %cst_5 : f32 to vector<8x128xf32>
    %7 = arith.cmpf ogt, %5, %6 : vector<8x128xf32>
    %cst_6 = arith.constant 0.00999999977 : f32
    %8 = vector.broadcast %cst_6 : f32 to vector<8x128xf32>
    %9 = arith.mulf %8, %5 : vector<8x128xf32>
    %10 = arith.select %7, %5, %9 : vector<8x128xi1>, vector<8x128xf32>
    %c1 = arith.constant 1 : index
    %c0_7 = arith.constant 0 : index
    %11 = vector.load %arg3[%c1, %c0_7] : memref<2x128xf32, #tpu.memory_space<vmem>>, vector<1x128xf32>
    %cst_8 = arith.constant dense<0.000000e+00> : vector<1x8xf32>
    %12 = tpu.matmul %11, %10, %cst_8 {dimension_numbers = #tpu.dot_dimension_numbers<[1], [1], [0], [0], [0, 0, 1, 0], [], []>} : vector<1x128xf32>, vector<8x128xf32>, vector<1x8xf32> -> vector<1x8xf32>
    %c0_9 = arith.constant 0 : index
    %13 = memref.load %arg4[%c0_9] : memref<1xf32, #tpu.memory_space<smem>>
    %14 = vector.broadcast %13 : f32 to vector<1x8xf32>
    %15 = arith.addf %12, %14 : vector<1x8xf32>
    %cst_10 = arith.constant 0.000000e+00 : f32
    %16 = vector.broadcast %cst_10 : f32 to vector<1x8xf32>
    %17 = arith.subf %16, %15 : vector<1x8xf32>
    %18 = math.exp %17 : vector<1x8xf32>
    %cst_11 = arith.constant 1.000000e+00 : f32
    %19 = vector.broadcast %cst_11 : f32 to vector<1x8xf32>
    %20 = arith.addf %19, %18 : vector<1x8xf32>
    %21 = tpu.reciprocal %20 : vector<1x8xf32> -> vector<1x8xf32>
    %c0_12 = arith.constant 0 : index
    %c0_13 = arith.constant 0 : index
    %22 = vector.load %arg5[%c0_12, %c0_13] : memref<1x8xf32, #tpu.memory_space<vmem>>, vector<1x8xf32>
    tpu.vector_store %arg5[%c0_12, %c0_13], %21 {strides = array<i32>} : memref<1x8xf32, #tpu.memory_space<vmem>>, vector<1x8xf32>,
    return
  }
  func.func @transform_0(%arg0: i32) -> (i32, i32) {
    %c0_i32 = arith.constant 0 : i32
    %c0_i32_0 = arith.constant 0 : i32
    return %arg0, %c0_i32 : i32, i32
  }
  func.func @transform_1(%arg0: i32) -> (i32, i32) {
    %c0_i32 = arith.constant 0 : i32
    %c0_i32_0 = arith.constant 0 : i32
    %c0_i32_1 = arith.constant 0 : i32
    return %c0_i32, %c0_i32_0 : i32, i32
  }
  func.func @transform_2(%arg0: i32) -> (i32, i32) {
    %c0_i32 = arith.constant 0 : i32
    %c0_i32_0 = arith.constant 0 : i32
    %c0_i32_1 = arith.constant 0 : i32
    return %c0_i32, %c0_i32_0 : i32, i32
  }
  func.func @transform_3(%arg0: i32) -> i32 {
    %c0_i32 = arith.constant 0 : i32
    %c0_i32_0 = arith.constant 0 : i32
    return %c0_i32 : i32
  }
  func.func @transform_4(%arg0: i32) -> (i32, i32) {
    %c0_i32 = arith.constant 0 : i32
    %c0_i32_0 = arith.constant 0 : i32
    return %c0_i32, %arg0 : i32, i32
  }
}

module attributes {stable_mosaic.version = 11 : i64} {
  func.func @discriminator_kernel(%arg0: i32, %arg1: memref<8x16xf32, #tpu.memory_space<vmem>>, %arg2: memref<16x128xf32, #tpu.memory_space<vmem>>, %arg3: memref<2x128xf32, #tpu.memory_space<vmem>>, %arg4: memref<1xf32, #tpu.memory_space<smem>>, %arg5: memref<1x8xf32, #tpu.memory_space<vmem>>) attributes {dimension_semantics = [#tpu.dimension_semantics<parallel>], iteration_bounds = array<i64: 1>, scalar_prefetch = 0 : i64, scratch_operands = 0 : i64, tpu.core_type = #tpu.core_type<tc>, window_params = [{transform_indices = @transform_0, window_bounds = array<i64: 8, 16>}, {pipeline_mode = #tpu.pipeline_mode<synchronous>, transform_indices = @transform_1, window_bounds = array<i64: 16, 128>}, {pipeline_mode = #tpu.pipeline_mode<synchronous>, transform_indices = @transform_2, window_bounds = array<i64: 2, 128>}, {transform_indices = @transform_3, window_bounds = array<i64: 1>}, {transform_indices = @transform_4, window_bounds = array<i64: 1, 8>}]} {
    %c0 = arith.constant 0 : index
    %c0_0 = arith.constant 0 : index
    %0 = vector.load %arg1[%c0, %c0_0] : memref<8x16xf32, #tpu.memory_space<vmem>>, vector<8x16xf32>
    %c0_1 = arith.constant 0 : index
    %c0_2 = arith.constant 0 : index
    %1 = vector.load %arg2[%c0_1, %c0_2] : memref<16x128xf32, #tpu.memory_space<vmem>>, vector<16x128xf32>
    %cst = arith.constant dense<0.000000e+00> : vector<8x128xf32>
    %2 = tpu.matmul %0, %1, %cst {dimension_numbers = #tpu.dot_dimension_numbers<[1], [0], [0], [1], [0, 0, 1, 1], [], []>} : vector<8x16xf32>, vector<16x128xf32>, vector<8x128xf32> -> vector<8x128xf32>
    %c0_3 = arith.constant 0 : index
    %c0_4 = arith.constant 0 : index
    %3 = vector.load %arg3[%c0_3, %c0_4] : memref<2x128xf32, #tpu.memory_space<vmem>>, vector<1x128xf32>
    %4 = vector.broadcast %3 : vector<1x128xf32> to vector<8x128xf32>
    %5 = arith.addf %2, %4 : vector<8x128xf32>
    %cst_5 = arith.constant 0.000000e+00 : f32
    %6 = vector.broadcast %cst_5 : f32 to vector<8x128xf32>
    %7 = arith.cmpf ogt, %5, %6 : vector<8x128xf32>
    %cst_6 = arith.constant 0.00999999977 : f32
    %8 = vector.broadcast %cst_6 : f32 to vector<8x128xf32>
    %9 = arith.mulf %8, %5 : vector<8x128xf32>
    %10 = arith.select %7, %5, %9 : vector<8x128xi1>, vector<8x128xf32>
    %c1 = arith.constant 1 : index
    %c0_7 = arith.constant 0 : index
    %11 = vector.load %arg3[%c1, %c0_7] : memref<2x128xf32, #tpu.memory_space<vmem>>, vector<1x128xf32>
    %cst_8 = arith.constant dense<0.000000e+00> : vector<1x8xf32>
    %12 = tpu.matmul %11, %10, %cst_8 {dimension_numbers = #tpu.dot_dimension_numbers<[1], [1], [0], [0], [0, 0, 1, 0], [], []>} : vector<1x128xf32>, vector<8x128xf32>, vector<1x8xf32> -> vector<1x8xf32>
    %c0_9 = arith.constant 0 : index
    %13 = memref.load %arg4[%c0_9] : memref<1xf32, #tpu.memory_space<smem>>
    %14 = vector.broadcast %13 : f32 to vector<1x8xf32>
    %15 = arith.addf %12, %14 : vector<1x8xf32>
    %cst_10 = arith.constant 0.000000e+00 : f32
    %16 = vector.broadcast %cst_10 : f32 to vector<1x8xf32>
    %17 = arith.subf %16, %15 : vector<1x8xf32>
    %18 = math.exp %17 : vector<1x8xf32>
    %cst_11 = arith.constant 1.000000e+00 : f32
    %19 = vector.broadcast %cst_11 : f32 to vector<1x8xf32>
    %20 = arith.addf %19, %18 : vector<1x8xf32>
    %21 = tpu.reciprocal %20 : vector<1x8xf32> -> vector<1x8xf32>
    %c0_12 = arith.constant 0 : index
    %c0_13 = arith.constant 0 : index
    %22 = vector.load %arg5[%c0_12, %c0_13] : memref<1x8xf32, #tpu.memory_space<vmem>>, vector<1x8xf32>
    tpu.vector_store %arg5[%c0_12, %c0_13], %21 {strides = array<i32>} : memref<1x8xf32, #tpu.memory_space<vmem>>, vector<1x8xf32>,
    return
  }
  func.func @transform_0(%arg0: i32) -> (i32, i32) {
    %c0_i32 = arith.constant 0 : i32
    %c0_i32_0 = arith.constant 0 : i32
    return %arg0, %c0_i32 : i32, i32
  }
  func.func @transform_1(%arg0: i32) -> (i32, i32) {
    %c0_i32 = arith.constant 0 : i32
    %c0_i32_0 = arith.constant 0 : i32
    %c0_i32_1 = arith.constant 0 : i32
    return %c0_i32, %c0_i32_0 : i32, i32
  }
  func.func @transform_2(%arg0: i32) -> (i32, i32) {
    %c0_i32 = arith.constant 0 : i32
    %c0_i32_0 = arith.constant 0 : i32
    %c0_i32_1 = arith.constant 0 : i32
    return %c0_i32, %c0_i32_0 : i32, i32
  }
  func.func @transform_3(%arg0: i32) -> i32 {
    %c0_i32 = arith.constant 0 : i32
    %c0_i32_0 = arith.constant 0 : i32
    return %c0_i32 : i32
  }
  func.func @transform_4(%arg0: i32) -> (i32, i32) {
    %c0_i32 = arith.constant 0 : i32
    %c0_i32_0 = arith.constant 0 : i32
    return %c0_i32, %arg0 : i32, i32
  }
}

</mosaic_0001>

<llo_original>
// kernel: tpu_custom_call.1
$region0: #{tpu_custom_call.1}
  #allocation0 [shape = 'u32[]', space=smem, size = 0x4, offset = 0x4, fixed_abs, tag = 'smem constant byte address 0x4 - core index']
  #allocation1 [shape = 'u32[144,128]{1,0:T(1,128)}', space=vmem, size = 0x12000, scoped, tag = 'internal scratch']
  #allocation2 [shape = 'f32[1]{0:T(128)S(6)}', space=smem, size = 0x200, scoped, tag = 'scoped memory for tpu_custom_call.1']
  %s0 = inlined_call_operand.hbm [shape: f32[8,16], index: 0, kind: input, shape index: {}]
  %s1 = inlined_call_operand.hbm [shape: f32[16,128], index: 1, kind: input, shape index: {}]
  %s2 = inlined_call_operand.vmem [shape: f32[2,128], index: 2, kind: input, shape index: {}]
  %s3 = inlined_call_operand.<no memory space> [shape: f32[1], index: 3, kind: input, shape index: {}]
  %s4 = inlined_call_operand.hbm [shape: f32[1,8], index: 4, kind: output, shape index: {}]
  %s5 = sld [smem:[#allocation0]]
  $region34: #{tpu_custom_call.1} parent=0
    _
  %s7 = ssub.s32 1, %s5
  %s8 = scalar_select 0, %s7, %s5
  %9 = sst [smem:[#allocation2]] %s3
  $region1: #{tpu_custom_call.1} parent=0
    #allocation3 [shape = 'u8[4096]{0}', space=vmem, size = 0x1000, scoped, tag = 'input window, operand 0, single buffered']
    #allocation4 [shape = 's32[1]{0}', space=sflag, size = 0x4, scoped, tag = 'scoped memory for tpu_custom_call.1']
    #allocation5 [shape = 's32[1]{0}', space=sflag, size = 0x4, scoped, tag = 'scoped memory for tpu_custom_call.1']
    #allocation6 [shape = 'u8[8192]{0}', space=vmem, size = 0x2000, scoped, tag = 'input window, operand 1, single buffered']
    #allocation7 [shape = 's32[1]{0}', space=sflag, size = 0x4, scoped, tag = 'scoped memory for tpu_custom_call.1']
    #allocation8 [shape = 'u8[512]{0}', space=vmem, size = 0x400, scoped, tag = 'output window, operand 0, single buffered']
    %10 = vsyncpa [#allocation4], 0
    %11 = vsyncpa [#allocation7], 0
    %12 = vsyncpa [#allocation5], 0
    // Predicated region
    $region2: #{tpu_custom_call.1} parent=1 // pred_check
      _
    $region3: #{tpu_custom_call.1} parent=1 // pred_check_branch
      %14 = sbr.rel (0) target = $region5
    $region4: #{tpu_custom_call.1} parent=1 // pred_region
      %s16 = ssub.s32 128, 128
      %17 = vsyncadd [#allocation4], %s16
      %s19 = sshll.u32 [#allocation3], 4
      %s20 = int_to_ptr.vmem [resolvable:$true] %s19
      %22 = dma.hbm_to_vmem [thread:$0]  %s0, 128, %s20, [#allocation4]
    $region5: #{tpu_custom_call.1} parent=1 // pred_fallthru
      _
    // Predicated region
    $region6: #{tpu_custom_call.1} parent=1 // pred_check
      _
    $region7: #{tpu_custom_call.1} parent=1 // pred_check_branch
      %24 = sbr.rel (0) target = $region9
    $region8: #{tpu_custom_call.1} parent=1 // pred_region
      %s26 = ssub.s32 256, 256
      %27 = vsyncadd [#allocation7], %s26
      %s28 = sshll.u32 [#allocation6], 4
      %s29 = int_to_ptr.vmem [resolvable:$true] %s28
      %34 = dma.hbm_to_vmem [thread:$0]  %s1, 256, %s29, [#allocation7], 128, 128, 8
    $region9: #{tpu_custom_call.1} parent=1 // pred_fallthru
      _
    // Predicated region
    $region10: #{tpu_custom_call.1} parent=1 // pred_check
      _
    $region11: #{tpu_custom_call.1} parent=1 // pred_check_branch
      %36 = sbr.rel (0) target = $region13
    $region12: #{tpu_custom_call.1} parent=1 // pred_region
      _
    $region13: #{tpu_custom_call.1} parent=1 // pred_fallthru
      _
    // Predicated region
    $region14: #{tpu_custom_call.1} parent=1 // pred_check
      _
    $region15: #{tpu_custom_call.1} parent=1 // pred_check_branch
      %38 = sbr.rel (0) target = $region17
    $region16: #{tpu_custom_call.1} parent=1 // pred_region
      _
    $region17: #{tpu_custom_call.1} parent=1 // pred_fallthru
      _
    // Predicated region
    $region18: #{tpu_custom_call.1} parent=1 // pred_check
      _
    $region19: #{tpu_custom_call.1} parent=1 // pred_check_branch
      %40 = sbr.rel (0) target = $region21
    $region20: #{tpu_custom_call.1} parent=1 // pred_region
      %41 = dma.done [#allocation4], 128
    $region21: #{tpu_custom_call.1} parent=1 // pred_fallthru
      _
    // Predicated region
    $region22: #{tpu_custom_call.1} parent=1 // pred_check
      _
    $region23: #{tpu_custom_call.1} parent=1 // pred_check_branch
      %43 = sbr.rel (0) target = $region25
    $region24: #{tpu_custom_call.1} parent=1 // pred_region
      %44 = dma.done [#allocation7], 256
    $region25: #{tpu_custom_call.1} parent=1 // pred_fallthru
      _
    %v45 = vld [vmem:[#allocation3] sm:$0xff]
    %v46 = vld [vmem:[#allocation6] sm:$0xff]
    %v47 = vld [vmem:[#allocation6 + $0x8] sm:$0xff]
    %v48 = vld [vmem:[%s2] sm:$0x1]
    %v49 = vlaneseq
    %v50 = vshrl.u32 %v49, 7
    %v51 = vsub.s32 0, %v50
    %v52 = vrot.slane %v48, %v51
    %vm53 = vcmask 130048
    %v55 = vsel %vm53, %v45, 0
    %57 = vmatprep.subr.mxu0 0.0
    %58 = vmatpush1.msra.mxu0 0.0
    %59 = vmatprep.subr.mxu0 0.0
    %60 = vmatpush1.msra.mxu0 0.0
    %61 = vmatprep.subr.mxu0 0.0
    %62 = vmatpush1.msra.mxu0 0.0
    %63 = vmatprep.subr.mxu0 0.0
    %64 = vmatpush1.msra.mxu0 0.0
    %65 = vmatprep.subr.mxu0 0.0
    %66 = vmatpush1.msra.mxu0 0.0
    %67 = vmatprep.subr.mxu0 0.0
    %68 = vmatpush1.msra.mxu0 0.0
    %69 = vmatprep.subr.mxu0 0.0
    %70 = vmatpush1.msra.mxu0 0.0
    %71 = vmatprep.subr.mxu0 0.0
    %72 = vmatpush1.msra.mxu0 0.0
    %73 = vmatprep.subr.mxu0 0.0
    %74 = vmatpush1.msra.mxu0 0.0
    %75 = vmatprep.subr.mxu0 0.0
    %76 = vmatpush1.msra.mxu0 0.0
    %77 = vmatprep.subr.mxu0 0.0
    %78 = vmatpush1.msra.mxu0 0.0
    %79 = vmatprep.subr.mxu0 0.0
    %80 = vmatpush1.msra.mxu0 0.0
    %81 = vmatprep.subr.mxu0 0.0
    %82 = vmatpush1.msra.mxu0 0.0
    %83 = vmatprep.subr.mxu0 0.0
    %84 = vmatpush1.msra.mxu0 0.0
    %85 = vmatprep.subr.mxu0 0.0
    %86 = vmatpush1.msra.mxu0 %v47
    %87 = vmatprep.subr.mxu0 0.0
    %88 = vmatpush1.msra.mxu0 %v46
    %89 = vmatprep.subr.mxu0 0.0
    %90 = vmatpush2.msra.mxu0 0.0
    %91 = vmatprep.subr.mxu0 0.0
    %92 = vmatpush2.msra.mxu0 0.0
    %93 = vmatprep.subr.mxu0 0.0
    %94 = vmatpush2.msra.mxu0 0.0
    %95 = vmatprep.subr.mxu0 0.0
    %96 = vmatpush2.msra.mxu0 0.0
    %97 = vmatprep.subr.mxu0 0.0
    %98 = vmatpush2.msra.mxu0 0.0
    %99 = vmatprep.subr.mxu0 0.0
    %100 = vmatpush2.msra.mxu0 0.0
    %101 = vmatprep.subr.mxu0 0.0
    %102 = vmatpush2.msra.mxu0 0.0
    %103 = vmatprep.subr.mxu0 0.0
    %104 = vmatpush2.msra.mxu0 0.0
    %105 = vmatprep.subr.mxu0 0.0
    %106 = vmatpush2.msra.mxu0 0.0
    %107 = vmatprep.subr.mxu0 0.0
    %108 = vmatpush2.msra.mxu0 0.0
    %109 = vmatprep.subr.mxu0 0.0
    %110 = vmatpush2.msra.mxu0 0.0
    %111 = vmatprep.subr.mxu0 0.0
    %112 = vmatpush2.msra.mxu0 0.0
    %113 = vmatprep.subr.mxu0 0.0
    %114 = vmatpush2.msra.mxu0 0.0
    %115 = vmatprep.subr.mxu0 0.0
    %116 = vmatpush2.msra.mxu0 0.0
    %117 = vmatprep.subr.mxu0 0.0
    %118 = vmatpush2.msra.mxu0 0.0
    %119 = vmatprep.subr.mxu0 0.0
    %120 = vmatpush2.msra.mxu0 0.0
    %121 = vmatprep.mubr.f32.mxu0 0.0
    %122 = vmatmul.mubr.f32.gmra.mxu0 %v55
    %v123 = vpop.f32.mrf.mxu0
    %v124 = vadd.f32 %v52, %v123
    %v125 = vpop.f32.mrf.mxu0
    %126 = vdwg.mxu0
    %vm127 = vcmp.gt.f32.partialorder %v124, 0.0
    %v128 = vmul.f32 %v124, 0.01
    %v129 = vsel %vm127, %v124, %v128
    %v130 = vld [vmem:[%s2 + $0x1] sm:$0x1]
    %s131 = sld [smem:[#allocation2]]
    %v132 = vstv %s131
    %133 = vmatprep.subr.mxu0 0.0
    %134 = vmatpush1.xpose.msra.mxu0 0.0
    %135 = vmatprep.subr.mxu0 0.0
    %136 = vmatpush1.xpose.msra.mxu0 0.0
    %137 = vmatprep.subr.mxu0 0.0
    %138 = vmatpush1.xpose.msra.mxu0 0.0
    %139 = vmatprep.subr.mxu0 0.0
    %140 = vmatpush1.xpose.msra.mxu0 0.0
    %141 = vmatprep.subr.mxu0 0.0
    %142 = vmatpush1.xpose.msra.mxu0 0.0
    %143 = vmatprep.subr.mxu0 0.0
    %144 = vmatpush1.xpose.msra.mxu0 0.0
    %145 = vmatprep.subr.mxu0 0.0
    %146 = vmatpush1.xpose.msra.mxu0 0.0
    %147 = vmatprep.subr.mxu0 0.0
    %148 = vmatpush1.xpose.msra.mxu0 0.0
    %149 = vmatprep.subr.mxu0 0.0
    %150 = vmatpush1.xpose.msra.mxu0 0.0
    %151 = vmatprep.subr.mxu0 0.0
    %152 = vmatpush1.xpose.msra.mxu0 0.0
    %153 = vmatprep.subr.mxu0 0.0
    %154 = vmatpush1.xpose.msra.mxu0 0.0
    %155 = vmatprep.subr.mxu0 0.0
    %156 = vmatpush1.xpose.msra.mxu0 0.0
    %157 = vmatprep.subr.mxu0 0.0
    %158 = vmatpush1.xpose.msra.mxu0 0.0
    %159 = vmatprep.subr.mxu0 0.0
    %160 = vmatpush1.xpose.msra.mxu0 0.0
    %161 = vmatprep.subr.mxu0 0.0
    %162 = vmatpush1.xpose.msra.mxu0 0.0
    %163 = vmatprep.subr.mxu0 0.0
    %164 = vmatpush1.xpose.msra.mxu0 %v129
    %165 = vmatprep.subr.mxu0 0.0
    %166 = vmatpush2.xpose.msra.mxu0 0.0
    %167 = vmatprep.subr.mxu0 0.0
    %168 = vmatpush2.xpose.msra.mxu0 0.0
    %169 = vmatprep.subr.mxu0 0.0
    %170 = vmatpush2.xpose.msra.mxu0 0.0
    %171 = vmatprep.subr.mxu0 0.0
    %172 = vmatpush2.xpose.msra.mxu0 0.0
    %173 = vmatprep.subr.mxu0 0.0
    %174 = vmatpush2.xpose.msra.mxu0 0.0
    %175 = vmatprep.subr.mxu0 0.0
    %176 = vmatpush2.xpose.msra.mxu0 0.0
    %177 = vmatprep.subr.mxu0 0.0
    %178 = vmatpush2.xpose.msra.mxu0 0.0
    %179 = vmatprep.subr.mxu0 0.0
    %180 = vmatpush2.xpose.msra.mxu0 0.0
    %181 = vmatprep.subr.mxu0 0.0
    %182 = vmatpush2.xpose.msra.mxu0 0.0
    %183 = vmatprep.subr.mxu0 0.0
    %184 = vmatpush2.xpose.msra.mxu0 0.0
    %185 = vmatprep.subr.mxu0 0.0
    %186 = vmatpush2.xpose.msra.mxu0 0.0
    %187 = vmatprep.subr.mxu0 0.0
    %188 = vmatpush2.xpose.msra.mxu0 0.0
    %189 = vmatprep.subr.mxu0 0.0
    %190 = vmatpush2.xpose.msra.mxu0 0.0
    %191 = vmatprep.subr.mxu0 0.0
    %192 = vmatpush2.xpose.msra.mxu0 0.0
    %193 = vmatprep.subr.mxu0 0.0
    %194 = vmatpush2.xpose.msra.mxu0 0.0
    %195 = vmatprep.subr.mxu0 0.0
    %196 = vmatpush2.xpose.msra.mxu0 0.0
    %197 = vmatprep.mubr.f32.mxu0 0.0
    %198 = vmatmul.mubr.f32.gmra.mxu0 %v130
    %v199 = vpop.f32.mrf.mxu0
    %v200 = vadd.f32 %v132, %v199
    %v201 = vpop.f32.mrf.mxu0
    %202 = vdwg.mxu0
    %v203 = vsub.f32 0.0, %v200
    %v204 = vmul.f32 %v203, 1.442695
    %v205 = vpow.pop %v204
    %v206 = vadd.f32 %v205, 1.0
    %v207 = vrcp.pop %v206
    %vm208 = vcmask 57344
    %209 = vst.msk [vmem:[#allocation8] sm:$0x1] %vm208, %v207
    // Predicated region
    $region26: #{tpu_custom_call.1} parent=1 // pred_check
      _
    $region27: #{tpu_custom_call.1} parent=1 // pred_check_branch
      %211 = sbr.rel (0) target = $region29
    $region28: #{tpu_custom_call.1} parent=1 // pred_region
      %s213 = ssub.s32 16, 16
      %214 = vsyncadd [#allocation5], %s213
      %s216 = sshll.u32 [#allocation8], 4
      %s217 = int_to_ptr.vmem [resolvable:$true] %s216
      %219 = dma.vmem_to_hbm [thread:$0]  %s217, 16, %s4, [#allocation5]
    $region29: #{tpu_custom_call.1} parent=1 // pred_fallthru
      _
    // Predicated region
    $region30: #{tpu_custom_call.1} parent=1 // pred_check
      _
    $region31: #{tpu_custom_call.1} parent=1 // pred_check_branch
      %221 = sbr.rel (0) target = $region33
    $region32: #{tpu_custom_call.1} parent=1 // pred_region
      %222 = dma.done [#allocation5], 16
    $region33: #{tpu_custom_call.1} parent=1 // pred_fallthru
      _
    %223 = vsyncpa [#allocation4], 1
    %224 = vsyncpa [#allocation7], 1
    %225 = vsyncpa [#allocation5], 1

// kernel: tpu_custom_call.1
$region0: #{tpu_custom_call.1}
  #allocation0 [shape = 'u32[]', space=smem, size = 0x4, offset = 0x4, fixed_abs, tag = 'smem constant byte address 0x4 - core index']
  #allocation1 [shape = 'u32[144,128]{1,0:T(1,128)}', space=vmem, size = 0x12000, scoped, tag = 'internal scratch']
  #allocation2 [shape = 'f32[1]{0:T(128)S(6)}', space=smem, size = 0x200, scoped, tag = 'scoped memory for tpu_custom_call.1']
  %s0 = inlined_call_operand.hbm [shape: f32[8,16], index: 0, kind: input, shape index: {}]
  %s1 = inlined_call_operand.hbm [shape: f32[16,128], index: 1, kind: input, shape index: {}]
  %s2 = inlined_call_operand.vmem [shape: f32[2,128], index: 2, kind: input, shape index: {}]
  %s3 = inlined_call_operand.<no memory space> [shape: f32[1], index: 3, kind: input, shape index: {}]
  %s4 = inlined_call_operand.hbm [shape: f32[1,8], index: 4, kind: output, shape index: {}]
  %s5 = sld [smem:[#allocation0]]
  $region34: #{tpu_custom_call.1} parent=0
    _
  %s7 = ssub.s32 1, %s5
  %s8 = scalar_select 0, %s7, %s5
  %9 = sst [smem:[#allocation2]] %s3
  $region1: #{tpu_custom_call.1} parent=0
    #allocation3 [shape = 'u8[4096]{0}', space=vmem, size = 0x1000, scoped, tag = 'input window, operand 0, single buffered']
    #allocation4 [shape = 's32[1]{0}', space=sflag, size = 0x4, scoped, tag = 'scoped memory for tpu_custom_call.1']
    #allocation5 [shape = 's32[1]{0}', space=sflag, size = 0x4, scoped, tag = 'scoped memory for tpu_custom_call.1']
    #allocation6 [shape = 'u8[8192]{0}', space=vmem, size = 0x2000, scoped, tag = 'input window, operand 1, single buffered']
    #allocation7 [shape = 's32[1]{0}', space=sflag, size = 0x4, scoped, tag = 'scoped memory for tpu_custom_call.1']
    #allocation8 [shape = 'u8[512]{0}', space=vmem, size = 0x400, scoped, tag = 'output window, operand 0, single buffered']
    %10 = vsyncpa [#allocation4], 0
    %11 = vsyncpa [#allocation7], 0
    %12 = vsyncpa [#allocation5], 0
    // Predicated region
    $region2: #{tpu_custom_call.1} parent=1 // pred_check
      _
    $region3: #{tpu_custom_call.1} parent=1 // pred_check_branch
      %14 = sbr.rel (0) target = $region5
    $region4: #{tpu_custom_call.1} parent=1 // pred_region
      %s16 = ssub.s32 128, 128
      %17 = vsyncadd [#allocation4], %s16
      %s19 = sshll.u32 [#allocation3], 4
      %s20 = int_to_ptr.vmem [resolvable:$true] %s19
      %22 = dma.hbm_to_vmem [thread:$0]  %s0, 128, %s20, [#allocation4]
    $region5: #{tpu_custom_call.1} parent=1 // pred_fallthru
      _
    // Predicated region
    $region6: #{tpu_custom_call.1} parent=1 // pred_check
      _
    $region7: #{tpu_custom_call.1} parent=1 // pred_check_branch
      %24 = sbr.rel (0) target = $region9
    $region8: #{tpu_custom_call.1} parent=1 // pred_region
      %s26 = ssub.s32 256, 256
      %27 = vsyncadd [#allocation7], %s26
      %s28 = sshll.u32 [#allocation6], 4
      %s29 = int_to_ptr.vmem [resolvable:$true] %s28
      %34 = dma.hbm_to_vmem [thread:$0]  %s1, 256, %s29, [#allocation7], 128, 128, 8
    $region9: #{tpu_custom_call.1} parent=1 // pred_fallthru
      _
    // Predicated region
    $region10: #{tpu_custom_call.1} parent=1 // pred_check
      _
    $region11: #{tpu_custom_call.1} parent=1 // pred_check_branch
      %36 = sbr.rel (0) target = $region13
    $region12: #{tpu_custom_call.1} parent=1 // pred_region
      _
    $region13: #{tpu_custom_call.1} parent=1 // pred_fallthru
      _
    // Predicated region
    $region14: #{tpu_custom_call.1} parent=1 // pred_check
      _
    $region15: #{tpu_custom_call.1} parent=1 // pred_check_branch
      %38 = sbr.rel (0) target = $region17
    $region16: #{tpu_custom_call.1} parent=1 // pred_region
      _
    $region17: #{tpu_custom_call.1} parent=1 // pred_fallthru
      _
    // Predicated region
    $region18: #{tpu_custom_call.1} parent=1 // pred_check
      _
    $region19: #{tpu_custom_call.1} parent=1 // pred_check_branch
      %40 = sbr.rel (0) target = $region21
    $region20: #{tpu_custom_call.1} parent=1 // pred_region
      %41 = dma.done [#allocation4], 128
    $region21: #{tpu_custom_call.1} parent=1 // pred_fallthru
      _
    // Predicated region
    $region22: #{tpu_custom_call.1} parent=1 // pred_check
      _
    $region23: #{tpu_custom_call.1} parent=1 // pred_check_branch
      %43 = sbr.rel (0) target = $region25
    $region24: #{tpu_custom_call.1} parent=1 // pred_region
      %44 = dma.done [#allocation7], 256
    $region25: #{tpu_custom_call.1} parent=1 // pred_fallthru
      _
    %v45 = vld [vmem:[#allocation3] sm:$0xff]
    %v46 = vld [vmem:[#allocation6] sm:$0xff]
    %v47 = vld [vmem:[#allocation6 + $0x8] sm:$0xff]
    %v48 = vld [vmem:[%s2] sm:$0x1]
    %v49 = vlaneseq
    %v50 = vshrl.u32 %v49, 7
    %v51 = vsub.s32 0, %v50
    %v52 = vrot.slane %v48, %v51
    %vm53 = vcmask 130048
    %v55 = vsel %vm53, %v45, 0
    %57 = vmatprep.subr.mxu0 0.0
    %58 = vmatpush1.msra.mxu0 0.0
    %59 = vmatprep.subr.mxu0 0.0
    %60 = vmatpush1.msra.mxu0 0.0
    %61 = vmatprep.subr.mxu0 0.0
    %62 = vmatpush1.msra.mxu0 0.0
    %63 = vmatprep.subr.mxu0 0.0
    %64 = vmatpush1.msra.mxu0 0.0
    %65 = vmatprep.subr.mxu0 0.0
    %66 = vmatpush1.msra.mxu0 0.0
    %67 = vmatprep.subr.mxu0 0.0
    %68 = vmatpush1.msra.mxu0 0.0
    %69 = vmatprep.subr.mxu0 0.0
    %70 = vmatpush1.msra.mxu0 0.0
    %71 = vmatprep.subr.mxu0 0.0
    %72 = vmatpush1.msra.mxu0 0.0
    %73 = vmatprep.subr.mxu0 0.0
    %74 = vmatpush1.msra.mxu0 0.0
    %75 = vmatprep.subr.mxu0 0.0
    %76 = vmatpush1.msra.mxu0 0.0
    %77 = vmatprep.subr.mxu0 0.0
    %78 = vmatpush1.msra.mxu0 0.0
    %79 = vmatprep.subr.mxu0 0.0
    %80 = vmatpush1.msra.mxu0 0.0
    %81 = vmatprep.subr.mxu0 0.0
    %82 = vmatpush1.msra.mxu0 0.0
    %83 = vmatprep.subr.mxu0 0.0
    %84 = vmatpush1.msra.mxu0 0.0
    %85 = vmatprep.subr.mxu0 0.0
    %86 = vmatpush1.msra.mxu0 %v47
    %87 = vmatprep.subr.mxu0 0.0
    %88 = vmatpush1.msra.mxu0 %v46
    %89 = vmatprep.subr.mxu0 0.0
    %90 = vmatpush2.msra.mxu0 0.0
    %91 = vmatprep.subr.mxu0 0.0
    %92 = vmatpush2.msra.mxu0 0.0
    %93 = vmatprep.subr.mxu0 0.0
    %94 = vmatpush2.msra.mxu0 0.0
    %95 = vmatprep.subr.mxu0 0.0
    %96 = vmatpush2.msra.mxu0 0.0
    %97 = vmatprep.subr.mxu0 0.0
    %98 = vmatpush2.msra.mxu0 0.0
    %99 = vmatprep.subr.mxu0 0.0
    %100 = vmatpush2.msra.mxu0 0.0
    %101 = vmatprep.subr.mxu0 0.0
    %102 = vmatpush2.msra.mxu0 0.0
    %103 = vmatprep.subr.mxu0 0.0
    %104 = vmatpush2.msra.mxu0 0.0
    %105 = vmatprep.subr.mxu0 0.0
    %106 = vmatpush2.msra.mxu0 0.0
    %107 = vmatprep.subr.mxu0 0.0
    %108 = vmatpush2.msra.mxu0 0.0
    %109 = vmatprep.subr.mxu0 0.0
    %110 = vmatpush2.msra.mxu0 0.0
    %111 = vmatprep.subr.mxu0 0.0
    %112 = vmatpush2.msra.mxu0 0.0
    %113 = vmatprep.subr.mxu0 0.0
    %114 = vmatpush2.msra.mxu0 0.0
    %115 = vmatprep.subr.mxu0 0.0
    %116 = vmatpush2.msra.mxu0 0.0
    %117 = vmatprep.subr.mxu0 0.0
    %118 = vmatpush2.msra.mxu0 0.0
    %119 = vmatprep.subr.mxu0 0.0
    %120 = vmatpush2.msra.mxu0 0.0
    %121 = vmatprep.mubr.f32.mxu0 0.0
    %122 = vmatmul.mubr.f32.gmra.mxu0 %v55
    %v123 = vpop.f32.mrf.mxu0
    %v124 = vadd.f32 %v52, %v123
    %v125 = vpop.f32.mrf.mxu0
    %126 = vdwg.mxu0
    %vm127 = vcmp.gt.f32.partialorder %v124, 0.0
    %v128 = vmul.f32 %v124, 0.01
    %v129 = vsel %vm127, %v124, %v128
    %v130 = vld [vmem:[%s2 + $0x1] sm:$0x1]
    %s131 = sld [smem:[#allocation2]]
    %v132 = vstv %s131
    %133 = vmatprep.subr.mxu0 0.0
    %134 = vmatpush1.xpose.msra.mxu0 0.0
    %135 = vmatprep.subr.mxu0 0.0
    %136 = vmatpush1.xpose.msra.mxu0 0.0
    %137 = vmatprep.subr.mxu0 0.0
    %138 = vmatpush1.xpose.msra.mxu0 0.0
    %139 = vmatprep.subr.mxu0 0.0
    %140 = vmatpush1.xpose.msra.mxu0 0.0
    %141 = vmatprep.subr.mxu0 0.0
    %142 = vmatpush1.xpose.msra.mxu0 0.0
    %143 = vmatprep.subr.mxu0 0.0
    %144 = vmatpush1.xpose.msra.mxu0 0.0
    %145 = vmatprep.subr.mxu0 0.0
    %146 = vmatpush1.xpose.msra.mxu0 0.0
    %147 = vmatprep.subr.mxu0 0.0
    %148 = vmatpush1.xpose.msra.mxu0 0.0
    %149 = vmatprep.subr.mxu0 0.0
    %150 = vmatpush1.xpose.msra.mxu0 0.0
    %151 = vmatprep.subr.mxu0 0.0
    %152 = vmatpush1.xpose.msra.mxu0 0.0
    %153 = vmatprep.subr.mxu0 0.0
    %154 = vmatpush1.xpose.msra.mxu0 0.0
    %155 = vmatprep.subr.mxu0 0.0
    %156 = vmatpush1.xpose.msra.mxu0 0.0
    %157 = vmatprep.subr.mxu0 0.0
    %158 = vmatpush1.xpose.msra.mxu0 0.0
    %159 = vmatprep.subr.mxu0 0.0
    %160 = vmatpush1.xpose.msra.mxu0 0.0
    %161 = vmatprep.subr.mxu0 0.0
    %162 = vmatpush1.xpose.msra.mxu0 0.0
    %163 = vmatprep.subr.mxu0 0.0
    %164 = vmatpush1.xpose.msra.mxu0 %v129
    %165 = vmatprep.subr.mxu0 0.0
    %166 = vmatpush2.xpose.msra.mxu0 0.0
    %167 = vmatprep.subr.mxu0 0.0
    %168 = vmatpush2.xpose.msra.mxu0 0.0
    %169 = vmatprep.subr.mxu0 0.0
    %170 = vmatpush2.xpose.msra.mxu0 0.0
    %171 = vmatprep.subr.mxu0 0.0
    %172 = vmatpush2.xpose.msra.mxu0 0.0
    %173 = vmatprep.subr.mxu0 0.0
    %174 = vmatpush2.xpose.msra.mxu0 0.0
    %175 = vmatprep.subr.mxu0 0.0
    %176 = vmatpush2.xpose.msra.mxu0 0.0
    %177 = vmatprep.subr.mxu0 0.0
    %178 = vmatpush2.xpose.msra.mxu0 0.0
    %179 = vmatprep.subr.mxu0 0.0
    %180 = vmatpush2.xpose.msra.mxu0 0.0
    %181 = vmatprep.subr.mxu0 0.0
    %182 = vmatpush2.xpose.msra.mxu0 0.0
    %183 = vmatprep.subr.mxu0 0.0
    %184 = vmatpush2.xpose.msra.mxu0 0.0
    %185 = vmatprep.subr.mxu0 0.0
    %186 = vmatpush2.xpose.msra.mxu0 0.0
    %187 = vmatprep.subr.mxu0 0.0
    %188 = vmatpush2.xpose.msra.mxu0 0.0
    %189 = vmatprep.subr.mxu0 0.0
    %190 = vmatpush2.xpose.msra.mxu0 0.0
    %191 = vmatprep.subr.mxu0 0.0
    %192 = vmatpush2.xpose.msra.mxu0 0.0
    %193 = vmatprep.subr.mxu0 0.0
    %194 = vmatpush2.xpose.msra.mxu0 0.0
    %195 = vmatprep.subr.mxu0 0.0
    %196 = vmatpush2.xpose.msra.mxu0 0.0
    %197 = vmatprep.mubr.f32.mxu0 0.0
    %198 = vmatmul.mubr.f32.gmra.mxu0 %v130
    %v199 = vpop.f32.mrf.mxu0
    %v200 = vadd.f32 %v132, %v199
    %v201 = vpop.f32.mrf.mxu0
    %202 = vdwg.mxu0
    %v203 = vsub.f32 0.0, %v200
    %v204 = vmul.f32 %v203, 1.442695
    %v205 = vpow.pop %v204
    %v206 = vadd.f32 %v205, 1.0
    %v207 = vrcp.pop %v206
    %vm208 = vcmask 57344
    %209 = vst.msk [vmem:[#allocation8] sm:$0x1] %vm208, %v207
    // Predicated region
    $region26: #{tpu_custom_call.1} parent=1 // pred_check
      _
    $region27: #{tpu_custom_call.1} parent=1 // pred_check_branch
      %211 = sbr.rel (0) target = $region29
    $region28: #{tpu_custom_call.1} parent=1 // pred_region
      %s213 = ssub.s32 16, 16
      %214 = vsyncadd [#allocation5], %s213
      %s216 = sshll.u32 [#allocation8], 4
      %s217 = int_to_ptr.vmem [resolvable:$true] %s216
      %219 = dma.vmem_to_hbm [thread:$0]  %s217, 16, %s4, [#allocation5]
    $region29: #{tpu_custom_call.1} parent=1 // pred_fallthru
      _
    // Predicated region
    $region30: #{tpu_custom_call.1} parent=1 // pred_check
      _
    $region31: #{tpu_custom_call.1} parent=1 // pred_check_branch
      %221 = sbr.rel (0) target = $region33
    $region32: #{tpu_custom_call.1} parent=1 // pred_region
      %222 = dma.done [#allocation5], 16
    $region33: #{tpu_custom_call.1} parent=1 // pred_fallthru
      _
    %223 = vsyncpa [#allocation4], 1
    %224 = vsyncpa [#allocation7], 1
    %225 = vsyncpa [#allocation5], 1

</llo_original>
